<compile_context>
chip_gen: v5e
topology: v5e:2x2
jax: 0.10.0
libtpu: 0.0.40
codegen_flags: <defaults>
</compile_context>

<pallas_src>
import numpy as np
import jax
import jax.numpy as jnp
from jax.experimental import pallas as pl
from jax.experimental.pallas import tpu as pltpu


def fnn_kernel(x_ref,                      # (D_in, TM)   transposed input tile
               w1_ref, b1_ref,             # (H, D_in), (H, 1)        pre-scaled
               w2_ref, b2_ref,             # (H, H),    (H, 1)        pre-scaled
               w3_ref, b3_ref,             # (H, H),    (H, 1)        pre-scaled
               w4_ref, b4_ref,             # (8, H),    (D_out, 1)    pre-scaled, sublane-padded
               o_ref):                     # (D_out, TM)
    x = x_ref[...]                         # (D_in, TM)
    w1 = w1_ref[...]                       # (H, D_in)
    d_in = x.shape[0]
    d_out = o_ref.shape[0]

    # Layer 1 on the VPU: K = D_in = 2 would be pure MXU fill/drain, so express it as
    # D_in broadcast FMAs.  Everything is lane-dense: (H, 1) * (1, TM) -> (H, TM).
    pre = b1_ref[...]                                    # (H, 1), broadcasts up
    for d in range(d_in):                                # static, tiny loop
        pre = pre + w1[:, d:d + 1] * x[d:d + 1, :]
    y1 = jnp.tanh(pre)                                   # (H, TM)

    # Hidden layers on the MXU; the streamed dimension is the batch tile (lanes).
    y2 = jnp.tanh(jnp.dot(w2_ref[...], y1,
                          preferred_element_type=jnp.float32) + b2_ref[...])
    y3 = jnp.tanh(jnp.dot(w3_ref[...], y2,
                          preferred_element_type=jnp.float32) + b3_ref[...])

    # Output layer: weight is zero-padded to 8 sublanes for a native-M matmul;
    # slice the real D_out rows before the lane-dense store.
    z4 = jnp.dot(w4_ref[...], y3, preferred_element_type=jnp.float32)   # (8, TM)
    o_ref[...] = z4[:d_out, :] + b4_ref[...]


def prepare_params(params, scale, *, sublane=8):
    """One-time transform (cache/jit this, not per step):
       - transpose every layer to the (out_features, in_features) / column-bias
         orientation used by the lane-dense kernel,
       - fold the n*a scale into every weight and bias,
       - sublane-pad the output weight to 8 rows (zeros) for a native-M matmul."""
    s = jnp.float32(scale)
    H, d_out = params["w4"].shape
    m_pad = max(sublane, ((d_out + sublane - 1) // sublane) * sublane)
    w4t = jnp.zeros((m_pad, H), jnp.float32).at[:d_out, :].set(s * params["w4"].T)
    return {
        "w1t": s * params["w1"].T, "b1t": s * params["b1"].reshape(-1, 1),
        "w2t": s * params["w2"].T, "b2t": s * params["b2"].reshape(-1, 1),
        "w3t": s * params["w3"].T, "b3t": s * params["b3"].reshape(-1, 1),
        "w4t": w4t,                "b4t": s * params["b4"].reshape(-1, 1),
        "d_out": int(d_out),
    }


def fnn_forward(x, p, *, tm=None):
    """x: (N, D_in) float32.  p: output of prepare_params.  Returns (N, D_out)."""
    N, D_in = x.shape
    H = p["w2t"].shape[0]
    d_out = p["d_out"]
    m_pad = p["w4t"].shape[0]

    if tm is None:
        # Guarantee >= 4 grid steps (>= 2 per v7x TensorCore) for large N, with
        # tm in [256, 2048] to amortize the ~0.35 us/step pipeline overhead.
        tm = min(2048, max(256, ((pl.cdiv(N, 4) + 127) // 128) * 128))

    grid_n = pl.cdiv(N, tm)
    n_pad = grid_n * tm

    # Lane-dense layout: batch along lanes.  The transpose/pad of the (N, 2) input
    # is an 8 B/row copy, negligible next to the kernel.
    x_t = x.T                                            # (D_in, N)
    if n_pad != N:
        x_t = jnp.pad(x_t, ((0, 0), (0, n_pad - N)))

    # Weight/bias blocks are the full (tiny) arrays with a constant block index so the
    # pipeline keeps them resident in VMEM across the whole grid.
    full = lambda shape: pl.BlockSpec(shape, lambda i: (0, 0))

    grid_spec = pltpu.PrefetchScalarGridSpec(
        num_scalar_prefetch=0,
        grid=(grid_n,),
        in_specs=[
            pl.BlockSpec((D_in, tm), lambda i: (0, i)),   # x^T (batch on lanes)
            full((H, D_in)),  full((H, 1)),               # layer 1
            full((H, H)),     full((H, 1)),               # layer 2
            full((H, H)),     full((H, 1)),               # layer 3
            full((m_pad, H)), full((d_out, 1)),           # layer 4
        ],
        out_specs=pl.BlockSpec((d_out, tm), lambda i: (0, i)),
    )

    out_t = pl.pallas_call(
        fnn_kernel,
        out_shape=jax.ShapeDtypeStruct((d_out, n_pad), jnp.float32),
        grid_spec=grid_spec,
        compiler_params=pltpu.CompilerParams(
            dimension_semantics=("parallel",)),
    )(x_t,
      p["w1t"], p["b1t"], p["w2t"], p["b2t"],
      p["w3t"], p["b3t"], p["w4t"], p["b4t"])

    # Drop the batch padding and return in the module's (N, D_out) orientation.
    return out_t[:, :N].T


def init_params(key, D_in, H, D_out):
    """Deterministic init matching the PyTorch module's __init__ distributions.
       Weights stored as (in_features, out_features) = transpose of torch layout."""
    ks = jax.random.split(key, 8)
    def nrm(k, shape, std):
        return (std * jax.random.normal(k, shape)).astype(jnp.float32)
    return {
        "w1": nrm(ks[0], (D_in, H), np.sqrt(2.0 / (D_in + H))),
        "w2": nrm(ks[1], (H, H),    np.sqrt(2.0 / (H + H))),
        "w3": nrm(ks[2], (H, H),    np.sqrt(2.0 / (H + H))),
        "w4": nrm(ks[3], (H, D_out), np.sqrt(2.0 / (H + D_out))),
        "b1": nrm(ks[4], (1, H), 1.0),
        "b2": nrm(ks[5], (1, H), 1.0),
        "b3": nrm(ks[6], (1, H), 1.0),
        "b4": nrm(ks[7], (1, D_out), 1.0),
    }


def fnn_reference(x, params, scale):
    s = jnp.float32(scale)
    y1 = jnp.tanh(s * (x @ params["w1"] + params["b1"]))
    y2 = jnp.tanh(s * (y1 @ params["w2"] + params["b2"]))
    y3 = jnp.tanh(s * (y2 @ params["w3"] + params["b3"]))
    return s * (y3 @ params["w4"] + params["b4"])


if __name__ == "__main__":
    # DEM rectangle problem: inputs are 2-D coordinates, output is 2-D displacement.
    D_in, H, D_out = 2, 32, 2
    N = 1000                     # collocation points (non-multiple of the tile:
                                 # exercises the pad + slice path)

    key = jax.random.PRNGKey(0)
    kx, kp = jax.random.split(key)
    x = jax.random.uniform(kx, (N, D_in), dtype=jnp.float32)

    params = init_params(kp, D_in, H, D_out)

    a = jnp.float32(0.1)         # the learnable 'a' parameter (init value 0.1)
    n = jnp.float32(1.0) / a     # n = 1 / a.data, fixed at init
    scale = n * a                # n * a scaling used in the forward pass

    prepped = prepare_params(params, scale)      # one-time fold + transpose + pad

    out = fnn_forward(x, prepped)
    out = jax.block_until_ready(out)
    assert out.shape == (N, D_out)

    ref = fnn_reference(x, params, scale)
    np.testing.assert_allclose(np.asarray(out), np.asarray(ref),
                               rtol=2e-5, atol=2e-5)

    print("KERNEL_OK")
</pallas_src>

<mosaic_0001>
module attributes {stable_mosaic.version = 11 : i64} {
  func.func @fnn_kernel(%arg0: i32, %arg1: memref<2x256xf32, #tpu.memory_space<vmem>>, %arg2: memref<32x2xf32, #tpu.memory_space<vmem>>, %arg3: memref<32x1xf32, #tpu.memory_space<vmem>>, %arg4: memref<32x32xf32, #tpu.memory_space<vmem>>, %arg5: memref<32x1xf32, #tpu.memory_space<vmem>>, %arg6: memref<32x32xf32, #tpu.memory_space<vmem>>, %arg7: memref<32x1xf32, #tpu.memory_space<vmem>>, %arg8: memref<8x32xf32, #tpu.memory_space<vmem>>, %arg9: memref<2x1xf32, #tpu.memory_space<vmem>>, %arg10: memref<2x256xf32, #tpu.memory_space<vmem>>) attributes {dimension_semantics = [#tpu.dimension_semantics<parallel>], iteration_bounds = array<i64: 4>, scalar_prefetch = 0 : i64, scratch_operands = 0 : i64, tpu.core_type = #tpu.core_type<tc>, window_params = [{transform_indices = @transform_0, window_bounds = array<i64: 2, 256>}, {pipeline_mode = #tpu.pipeline_mode<synchronous>, transform_indices = @transform_1, window_bounds = array<i64: 32, 2>}, {pipeline_mode = #tpu.pipeline_mode<synchronous>, transform_indices = @transform_2, window_bounds = array<i64: 32, 1>}, {pipeline_mode = #tpu.pipeline_mode<synchronous>, transform_indices = @transform_3, window_bounds = array<i64: 32, 32>}, {pipeline_mode = #tpu.pipeline_mode<synchronous>, transform_indices = @transform_4, window_bounds = array<i64: 32, 1>}, {pipeline_mode = #tpu.pipeline_mode<synchronous>, transform_indices = @transform_5, window_bounds = array<i64: 32, 32>}, {pipeline_mode = #tpu.pipeline_mode<synchronous>, transform_indices = @transform_6, window_bounds = array<i64: 32, 1>}, {pipeline_mode = #tpu.pipeline_mode<synchronous>, transform_indices = @transform_7, window_bounds = array<i64: 8, 32>}, {pipeline_mode = #tpu.pipeline_mode<synchronous>, transform_indices = @transform_8, window_bounds = array<i64: 2, 1>}, {transform_indices = @transform_9, window_bounds = array<i64: 2, 256>}]} {
    %c0 = arith.constant 0 : index
    %c0_0 = arith.constant 0 : index
    %0 = vector.load %arg1[%c0, %c0_0] : memref<2x256xf32, #tpu.memory_space<vmem>>, vector<2x256xf32>
    %c0_1 = arith.constant 0 : index
    %c0_2 = arith.constant 0 : index
    %1 = vector.load %arg2[%c0_1, %c0_2] : memref<32x2xf32, #tpu.memory_space<vmem>>, vector<32x2xf32>
    %c0_3 = arith.constant 0 : index
    %c0_4 = arith.constant 0 : index
    %2 = vector.load %arg3[%c0_3, %c0_4] : memref<32x1xf32, #tpu.memory_space<vmem>>, vector<32x1xf32>
    %3 = vector.extract_strided_slice %1 {offsets = [0, 0], sizes = [32, 1], strides = [1, 1]} : vector<32x2xf32> to vector<32x1xf32>
    %4 = vector.extract_strided_slice %0 {offsets = [0, 0], sizes = [1, 256], strides = [1, 1]} : vector<2x256xf32> to vector<1x256xf32>
    %5 = vector.broadcast %3 : vector<32x1xf32> to vector<32x256xf32>
    %6 = vector.broadcast %4 : vector<1x256xf32> to vector<32x256xf32>
    %7 = arith.mulf %5, %6 : vector<32x256xf32>
    %8 = vector.broadcast %2 : vector<32x1xf32> to vector<32x256xf32>
    %9 = arith.addf %8, %7 : vector<32x256xf32>
    %10 = vector.extract_strided_slice %1 {offsets = [0, 1], sizes = [32, 1], strides = [1, 1]} : vector<32x2xf32> to vector<32x1xf32>
    %11 = vector.extract_strided_slice %0 {offsets = [1, 0], sizes = [1, 256], strides = [1, 1]} : vector<2x256xf32> to vector<1x256xf32>
    %12 = vector.broadcast %10 : vector<32x1xf32> to vector<32x256xf32>
    %13 = vector.broadcast %11 : vector<1x256xf32> to vector<32x256xf32>
    %14 = arith.mulf %12, %13 : vector<32x256xf32>
    %15 = arith.addf %9, %14 : vector<32x256xf32>
    %16 = math.tanh %15 : vector<32x256xf32>
    %c0_5 = arith.constant 0 : index
    %c0_6 = arith.constant 0 : index
    %17 = vector.load %arg4[%c0_5, %c0_6] : memref<32x32xf32, #tpu.memory_space<vmem>>, vector<32x32xf32>
    %cst = arith.constant dense<0.000000e+00> : vector<32x256xf32>
    %18 = tpu.matmul %17, %16, %cst {dimension_numbers = #tpu.dot_dimension_numbers<[1], [0], [0], [1], [0, 0, 1, 1], [], []>} : vector<32x32xf32>, vector<32x256xf32>, vector<32x256xf32> -> vector<32x256xf32>
    %c0_7 = arith.constant 0 : index
    %c0_8 = arith.constant 0 : index
    %19 = vector.load %arg5[%c0_7, %c0_8] : memref<32x1xf32, #tpu.memory_space<vmem>>, vector<32x1xf32>
    %20 = vector.broadcast %19 : vector<32x1xf32> to vector<32x256xf32>
    %21 = arith.addf %18, %20 : vector<32x256xf32>
    %22 = math.tanh %21 : vector<32x256xf32>
    %c0_9 = arith.constant 0 : index
    %c0_10 = arith.constant 0 : index
    %23 = vector.load %arg6[%c0_9, %c0_10] : memref<32x32xf32, #tpu.memory_space<vmem>>, vector<32x32xf32>
    %cst_11 = arith.constant dense<0.000000e+00> : vector<32x256xf32>
    %24 = tpu.matmul %23, %22, %cst_11 {dimension_numbers = #tpu.dot_dimension_numbers<[1], [0], [0], [1], [0, 0, 1, 1], [], []>} : vector<32x32xf32>, vector<32x256xf32>, vector<32x256xf32> -> vector<32x256xf32>
    %c0_12 = arith.constant 0 : index
    %c0_13 = arith.constant 0 : index
    %25 = vector.load %arg7[%c0_12, %c0_13] : memref<32x1xf32, #tpu.memory_space<vmem>>, vector<32x1xf32>
    %26 = vector.broadcast %25 : vector<32x1xf32> to vector<32x256xf32>
    %27 = arith.addf %24, %26 : vector<32x256xf32>
    %28 = math.tanh %27 : vector<32x256xf32>
    %c0_14 = arith.constant 0 : index
    %c0_15 = arith.constant 0 : index
    %29 = vector.load %arg8[%c0_14, %c0_15] : memref<8x32xf32, #tpu.memory_space<vmem>>, vector<8x32xf32>
    %cst_16 = arith.constant dense<0.000000e+00> : vector<8x256xf32>
    %30 = tpu.matmul %29, %28, %cst_16 {dimension_numbers = #tpu.dot_dimension_numbers<[1], [0], [0], [1], [0, 0, 1, 1], [], []>} : vector<8x32xf32>, vector<32x256xf32>, vector<8x256xf32> -> vector<8x256xf32>
    %31 = vector.extract_strided_slice %30 {offsets = [0, 0], sizes = [2, 256], strides = [1, 1]} : vector<8x256xf32> to vector<2x256xf32>
    %c0_17 = arith.constant 0 : index
    %c0_18 = arith.constant 0 : index
    %32 = vector.load %arg9[%c0_17, %c0_18] : memref<2x1xf32, #tpu.memory_space<vmem>>, vector<2x1xf32>
    %33 = vector.broadcast %32 : vector<2x1xf32> to vector<2x256xf32>
    %34 = arith.addf %31, %33 : vector<2x256xf32>
    %c0_19 = arith.constant 0 : index
    %c0_20 = arith.constant 0 : index
    %35 = vector.load %arg10[%c0_19, %c0_20] : memref<2x256xf32, #tpu.memory_space<vmem>>, vector<2x256xf32>
    tpu.vector_store %arg10[%c0_19, %c0_20], %34 {strides = array<i32>} : memref<2x256xf32, #tpu.memory_space<vmem>>, vector<2x256xf32>,
    return
  }
  func.func @transform_0(%arg0: i32) -> (i32, i32) {
    %c0_i32 = arith.constant 0 : i32
    %c0_i32_0 = arith.constant 0 : i32
    return %c0_i32, %arg0 : i32, i32
  }
  func.func @transform_1(%arg0: i32) -> (i32, i32) {
    %c0_i32 = arith.constant 0 : i32
    %c0_i32_0 = arith.constant 0 : i32
    %c0_i32_1 = arith.constant 0 : i32
    return %c0_i32, %c0_i32_0 : i32, i32
  }
  func.func @transform_2(%arg0: i32) -> (i32, i32) {
    %c0_i32 = arith.constant 0 : i32
    %c0_i32_0 = arith.constant 0 : i32
    %c0_i32_1 = arith.constant 0 : i32
    return %c0_i32, %c0_i32_0 : i32, i32
  }
  func.func @transform_3(%arg0: i32) -> (i32, i32) {
    %c0_i32 = arith.constant 0 : i32
    %c0_i32_0 = arith.constant 0 : i32
    %c0_i32_1 = arith.constant 0 : i32
    return %c0_i32, %c0_i32_0 : i32, i32
  }
  func.func @transform_4(%arg0: i32) -> (i32, i32) {
    %c0_i32 = arith.constant 0 : i32
    %c0_i32_0 = arith.constant 0 : i32
    %c0_i32_1 = arith.constant 0 : i32
    return %c0_i32, %c0_i32_0 : i32, i32
  }
  func.func @transform_5(%arg0: i32) -> (i32, i32) {
    %c0_i32 = arith.constant 0 : i32
    %c0_i32_0 = arith.constant 0 : i32
    %c0_i32_1 = arith.constant 0 : i32
    return %c0_i32, %c0_i32_0 : i32, i32
  }
  func.func @transform_6(%arg0: i32) -> (i32, i32) {
    %c0_i32 = arith.constant 0 : i32
    %c0_i32_0 = arith.constant 0 : i32
    %c0_i32_1 = arith.constant 0 : i32
    return %c0_i32, %c0_i32_0 : i32, i32
  }
  func.func @transform_7(%arg0: i32) -> (i32, i32) {
    %c0_i32 = arith.constant 0 : i32
    %c0_i32_0 = arith.constant 0 : i32
    %c0_i32_1 = arith.constant 0 : i32
    return %c0_i32, %c0_i32_0 : i32, i32
  }
  func.func @transform_8(%arg0: i32) -> (i32, i32) {
    %c0_i32 = arith.constant 0 : i32
    %c0_i32_0 = arith.constant 0 : i32
    %c0_i32_1 = arith.constant 0 : i32
    return %c0_i32, %c0_i32_0 : i32, i32
  }
  func.func @transform_9(%arg0: i32) -> (i32, i32) {
    %c0_i32 = arith.constant 0 : i32
    %c0_i32_0 = arith.constant 0 : i32
    return %c0_i32, %arg0 : i32, i32
  }
}

</mosaic_0001>

<llo_original>
// kernel: tpu_custom_call.1
$region0: #{tpu_custom_call.1}
  #allocation0 [shape = 'u32[]', space=smem, size = 0x4, offset = 0x4, fixed_abs, tag = 'smem constant byte address 0x4 - core index']
  #allocation1 [shape = 'u32[72,128]{1,0:T(1,128)}', space=vmem, size = 0x9000, scoped, tag = 'internal scratch']
  %s0 = inlined_call_operand.vmem [shape: f32[2,1024], index: 0, kind: input, shape index: {}]
  %s1 = inlined_call_operand.vmem [shape: f32[32,2], index: 1, kind: input, shape index: {}]
  %s2 = inlined_call_operand.vmem [shape: f32[32,1], index: 2, kind: input, shape index: {}]
  %s3 = inlined_call_operand.vmem [shape: f32[32,32], index: 3, kind: input, shape index: {}]
  %s4 = inlined_call_operand.vmem [shape: f32[32,1], index: 4, kind: input, shape index: {}]
  %s5 = inlined_call_operand.vmem [shape: f32[32,32], index: 5, kind: input, shape index: {}]
  %s6 = inlined_call_operand.vmem [shape: f32[32,1], index: 6, kind: input, shape index: {}]
  %s7 = inlined_call_operand.vmem [shape: f32[8,32], index: 7, kind: input, shape index: {}]
  %s8 = inlined_call_operand.vmem [shape: f32[2,1], index: 8, kind: input, shape index: {}]
  %s9 = inlined_call_operand.hbm [shape: f32[2,1024], index: 9, kind: output, shape index: {}]
  %s10 = sld [smem:[#allocation0]]
  $region69: #{tpu_custom_call.1} parent=0
    _
  %s12 = ssub.s32 1, %s10
  %s13 = scalar_select 0, %s12, %s10
  $region1: #{tpu_custom_call.1} parent=0
    #allocation2 [shape = 'u8[4096]{0}', space=vmem, size = 0x1000, scoped, tag = 'output window, operand 0']
    #allocation3 [shape = 's32[2]{0}', space=sflag, size = 0x8, scoped, tag = 'scoped memory for tpu_custom_call.1']
    %14 = vsyncpa [#allocation3], 0
    %s15 = scalar_lea.sflag [#allocation3], 1
    %16 = vsyncpa %s15, 0
    loop: start=0, step=1, limit=6
    $region2: #{tpu_custom_call.1} parent=1 // loop_pre_header
      _
    $region3: #{tpu_custom_call.1} parent=1 // loop_header
      %s18 = sphi 0, %s22
      %p19 = scmp.ge.s32.totalorder %s18, 6
      %s28 = sphi 0, %s30
      %s31 = sphi 0, %s28
      %s32 = sphi 0, %s31
      %s48 = sphi 0, %s32
      %s52 = sphi 0, %s52
      %s54 = sphi 0, %s52
      %s55 = sphi 0, %s54
      %s69 = sphi 0, %s55
      %s73 = sphi 0, %s73
      %s75 = sphi 0, %s73
      %s76 = sphi 0, %s75
      %s90 = sphi 0, %s76
      %s94 = sphi 0, %s94
      %s96 = sphi 0, %s94
      %s97 = sphi 0, %s96
      %s111 = sphi 0, %s97
      %s115 = sphi 0, %s115
      %s117 = sphi 0, %s115
      %s118 = sphi 0, %s117
      %s132 = sphi 0, %s118
      %s136 = sphi 0, %s136
      %s138 = sphi 0, %s136
      %s139 = sphi 0, %s138
      %s153 = sphi 0, %s139
      %s157 = sphi 0, %s157
      %s159 = sphi 0, %s157
      %s160 = sphi 0, %s159
      %s174 = sphi 0, %s160
      %s178 = sphi 0, %s178
      %s180 = sphi 0, %s178
      %s181 = sphi 0, %s180
      %s195 = sphi 0, %s181
      %s199 = sphi 0, %s199
      %s201 = sphi 0, %s199
      %s202 = sphi 0, %s201
      %s216 = sphi 0, %s202
      %s222 = sphi 0, %s224
      %s225 = sphi 0, %s222
      %s226 = sphi 0, %s225
      %s242 = sphi 0, %s226
    $region4: #{tpu_custom_call.1} parent=1 // loop_header_branch
      %21 = sbr.rel (%p19) target = $region8
    $region5: #{tpu_custom_call.1} parent=1 // loop_body
      %s23 = ssub.s32 %s18, 1
      %s24 = ssub.s32 %s18, 2
      %s25 = sadd.s32 %s18, 1
      %s26 = ssub.s32 %s18, %s25
      %p27 = scmp.eq.s32.totalorder %s26, 0
      %s29 = sadd.s32 %s28, 1
      %s30 = scalar_select %p27, %s28, %s29
      %p33 = pneg %p27
      %p34 = scmp.eq.s32.totalorder %s18, 3
      %p35 = por %p33, %p34
      %p36 = scmp.ne.s32.totalorder %s28, %s31
      %p37 = scmp.eq.s32.totalorder %s18, 0
      %p38 = por %p36, %p37
      %p39 = scmp.ne.s32.totalorder %s28, %s31
      %p40 = scmp.eq.s32.totalorder %s23, 3
      %p41 = por %p39, %p40
      %p42 = scmp.ne.s32.totalorder %s31, %s32
      %p43 = scmp.eq.s32.totalorder %s23, 0
      %p44 = por %p42, %p43
      %p45 = scmp.ne.s32.totalorder %s31, %s32
      %p46 = scmp.eq.s32.totalorder %s24, 3
      %p47 = por %p45, %p46
      %p49 = scmp.ne.s32.totalorder %s32, %s48
      %p50 = scmp.eq.s32.totalorder %s24, 0
      %p51 = por %p49, %p50
      %s53 = sadd.s32 %s52, 1
      %p56 = scmp.eq.s32.totalorder %s18, 3
      %p57 = scmp.ne.s32.totalorder %s52, %s54
      %p58 = scmp.eq.s32.totalorder %s18, 0
      %p59 = por %p57, %p58
      %p60 = scmp.ne.s32.totalorder %s52, %s54
      %p61 = scmp.eq.s32.totalorder %s23, 3
      %p62 = por %p60, %p61
      %p63 = scmp.ne.s32.totalorder %s54, %s55
      %p64 = scmp.eq.s32.totalorder %s23, 0
      %p65 = por %p63, %p64
      %p66 = scmp.ne.s32.totalorder %s54, %s55
      %p67 = scmp.eq.s32.totalorder %s24, 3
      %p68 = por %p66, %p67
      %p70 = scmp.ne.s32.totalorder %s55, %s69
      %p71 = scmp.eq.s32.totalorder %s24, 0
      %p72 = por %p70, %p71
      %s74 = sadd.s32 %s73, 1
      %p77 = scmp.eq.s32.totalorder %s18, 3
      %p78 = scmp.ne.s32.totalorder %s73, %s75
      %p79 = scmp.eq.s32.totalorder %s18, 0
      %p80 = por %p78, %p79
      %p81 = scmp.ne.s32.totalorder %s73, %s75
      %p82 = scmp.eq.s32.totalorder %s23, 3
      %p83 = por %p81, %p82
      %p84 = scmp.ne.s32.totalorder %s75, %s76
      %p85 = scmp.eq.s32.totalorder %s23, 0
      %p86 = por %p84, %p85
      %p87 = scmp.ne.s32.totalorder %s75, %s76
      %p88 = scmp.eq.s32.totalorder %s24, 3
      %p89 = por %p87, %p88
      %p91 = scmp.ne.s32.totalorder %s76, %s90
      %p92 = scmp.eq.s32.totalorder %s24, 0
      %p93 = por %p91, %p92
      %s95 = sadd.s32 %s94, 1
      %p98 = scmp.eq.s32.totalorder %s18, 3
      %p99 = scmp.ne.s32.totalorder %s94, %s96
      %p100 = scmp.eq.s32.totalorder %s18, 0
      %p101 = por %p99, %p100
      %p102 = scmp.ne.s32.totalorder %s94, %s96
      %p103 = scmp.eq.s32.totalorder %s23, 3
      %p104 = por %p102, %p103
      %p105 = scmp.ne.s32.totalorder %s96, %s97
      %p106 = scmp.eq.s32.totalorder %s23, 0
      %p107 = por %p105, %p106
      %p108 = scmp.ne.s32.totalorder %s96, %s97
      %p109 = scmp.eq.s32.totalorder %s24, 3
      %p110 = por %p108, %p109
      %p112 = scmp.ne.s32.totalorder %s97, %s111
      %p113 = scmp.eq.s32.totalorder %s24, 0
      %p114 = por %p112, %p113
      %s116 = sadd.s32 %s115, 1
      %p119 = scmp.eq.s32.totalorder %s18, 3
      %p120 = scmp.ne.s32.totalorder %s115, %s117
      %p121 = scmp.eq.s32.totalorder %s18, 0
      %p122 = por %p120, %p121
      %p123 = scmp.ne.s32.totalorder %s115, %s117
      %p124 = scmp.eq.s32.totalorder %s23, 3
      %p125 = por %p123, %p124
      %p126 = scmp.ne.s32.totalorder %s117, %s118
      %p127 = scmp.eq.s32.totalorder %s23, 0
      %p128 = por %p126, %p127
      %p129 = scmp.ne.s32.totalorder %s117, %s118
      %p130 = scmp.eq.s32.totalorder %s24, 3
      %p131 = por %p129, %p130
      %p133 = scmp.ne.s32.totalorder %s118, %s132
      %p134 = scmp.eq.s32.totalorder %s24, 0
      %p135 = por %p133, %p134
      %s137 = sadd.s32 %s136, 1
      %p140 = scmp.eq.s32.totalorder %s18, 3
      %p141 = scmp.ne.s32.totalorder %s136, %s138
      %p142 = scmp.eq.s32.totalorder %s18, 0
      %p143 = por %p141, %p142
      %p144 = scmp.ne.s32.totalorder %s136, %s138
      %p145 = scmp.eq.s32.totalorder %s23, 3
      %p146 = por %p144, %p145
      %p147 = scmp.ne.s32.totalorder %s138, %s139
      %p148 = scmp.eq.s32.totalorder %s23, 0
      %p149 = por %p147, %p148
      %p150 = scmp.ne.s32.totalorder %s138, %s139
      %p151 = scmp.eq.s32.totalorder %s24, 3
      %p152 = por %p150, %p151
      %p154 = scmp.ne.s32.totalorder %s139, %s153
      %p155 = scmp.eq.s32.totalorder %s24, 0
      %p156 = por %p154, %p155
      %s158 = sadd.s32 %s157, 1
      %p161 = scmp.eq.s32.totalorder %s18, 3
      %p162 = scmp.ne.s32.totalorder %s157, %s159
      %p163 = scmp.eq.s32.totalorder %s18, 0
      %p164 = por %p162, %p163
      %p165 = scmp.ne.s32.totalorder %s157, %s159
      %p166 = scmp.eq.s32.totalorder %s23, 3
      %p167 = por %p165, %p166
      %p168 = scmp.ne.s32.totalorder %s159, %s160
      %p169 = scmp.eq.s32.totalorder %s23, 0
      %p170 = por %p168, %p169
      %p171 = scmp.ne.s32.totalorder %s159, %s160
      %p172 = scmp.eq.s32.totalorder %s24, 3
      %p173 = por %p171, %p172
      %p175 = scmp.ne.s32.totalorder %s160, %s174
      %p176 = scmp.eq.s32.totalorder %s24, 0
      %p177 = por %p175, %p176
      %s179 = sadd.s32 %s178, 1
      %p182 = scmp.eq.s32.totalorder %s18, 3
      %p183 = scmp.ne.s32.totalorder %s178, %s180
      %p184 = scmp.eq.s32.totalorder %s18, 0
      %p185 = por %p183, %p184
      %p186 = scmp.ne.s32.totalorder %s178, %s180
      %p187 = scmp.eq.s32.totalorder %s23, 3
      %p188 = por %p186, %p187
      %p189 = scmp.ne.s32.totalorder %s180, %s181
      %p190 = scmp.eq.s32.totalorder %s23, 0
      %p191 = por %p189, %p190
      %p192 = scmp.ne.s32.totalorder %s180, %s181
      %p193 = scmp.eq.s32.totalorder %s24, 3
      %p194 = por %p192, %p193
      %p196 = scmp.ne.s32.totalorder %s181, %s195
      %p197 = scmp.eq.s32.totalorder %s24, 0
      %p198 = por %p196, %p197
      %s200 = sadd.s32 %s199, 1
      %p203 = scmp.eq.s32.totalorder %s18, 3
      %p204 = scmp.ne.s32.totalorder %s199, %s201
      %p205 = scmp.eq.s32.totalorder %s18, 0
      %p206 = por %p204, %p205
      %p207 = scmp.ne.s32.totalorder %s199, %s201
      %p208 = scmp.eq.s32.totalorder %s23, 3
      %p209 = por %p207, %p208
      %p210 = scmp.ne.s32.totalorder %s201, %s202
      %p211 = scmp.eq.s32.totalorder %s23, 0
      %p212 = por %p210, %p211
      %p213 = scmp.ne.s32.totalorder %s201, %s202
      %p214 = scmp.eq.s32.totalorder %s24, 3
      %p215 = por %p213, %p214
      %p217 = scmp.ne.s32.totalorder %s202, %s216
      %p218 = scmp.eq.s32.totalorder %s24, 0
      %p219 = por %p217, %p218
      %s220 = ssub.s32 %s18, %s25
      %p221 = scmp.eq.s32.totalorder %s220, 0
      %s223 = sadd.s32 %s222, 1
      %s224 = scalar_select %p221, %s222, %s223
      %p227 = pneg %p221
      %p228 = scmp.eq.s32.totalorder %s18, 3
      %p229 = por %p227, %p228
      %p230 = scmp.ne.s32.totalorder %s222, %s225
      %p231 = scmp.eq.s32.totalorder %s18, 0
      %p232 = por %p230, %p231
      %p233 = scmp.ne.s32.totalorder %s222, %s225
      %p234 = scmp.eq.s32.totalorder %s23, 3
      %p235 = por %p233, %p234
      %p236 = scmp.ne.s32.totalorder %s225, %s226
      %p237 = scmp.eq.s32.totalorder %s23, 0
      %p238 = por %p236, %p237
      %p239 = scmp.ne.s32.totalorder %s225, %s226
      %p240 = scmp.eq.s32.totalorder %s24, 3
      %p241 = por %p239, %p240
      %p243 = scmp.ne.s32.totalorder %s226, %s242
      %p244 = scmp.eq.s32.totalorder %s24, 0
      %p245 = por %p243, %p244
      %p246 = scmp.le.s32.totalorder 1, %s18
      %p247 = scmp.lt.s32.totalorder %s18, 5
      %p248 = pnand %p246, %p247
      %p249 = pneg %p248
      // Predicated region
      $region9: #{tpu_custom_call.1} parent=5 // pred_check
        _
      $region10: #{tpu_custom_call.1} parent=5 // pred_check_branch
        %251 = sbr.rel (%p248) target = $region12
      $region11: #{tpu_custom_call.1} parent=5 // pred_region
        %s252 = ssub.s32 %s18, 1
        // Predicated region
        $region13: #{tpu_custom_call.1} parent=11 // pred_check
          %p253 = pneg %p65
        $region14: #{tpu_custom_call.1} parent=11 // pred_check_branch
          %255 = sbr.rel (%p253) target = $region16
        $region15: #{tpu_custom_call.1} parent=11 // pred_region
          _
        $region16: #{tpu_custom_call.1} parent=11 // pred_fallthru
          _
        // Predicated region
        $region17: #{tpu_custom_call.1} parent=11 // pred_check
          %p256 = pneg %p86
        $region18: #{tpu_custom_call.1} parent=11 // pred_check_branch
          %258 = sbr.rel (%p256) target = $region20
        $region19: #{tpu_custom_call.1} parent=11 // pred_region
          _
        $region20: #{tpu_custom_call.1} parent=11 // pred_fallthru
          _
        // Predicated region
        $region21: #{tpu_custom_call.1} parent=11 // pred_check
          %p259 = pneg %p107
        $region22: #{tpu_custom_call.1} parent=11 // pred_check_branch
          %261 = sbr.rel (%p259) target = $region24
        $region23: #{tpu_custom_call.1} parent=11 // pred_region
          _
        $region24: #{tpu_custom_call.1} parent=11 // pred_fallthru
          _
        // Predicated region
        $region25: #{tpu_custom_call.1} parent=11 // pred_check
          %p262 = pneg %p128
        $region26: #{tpu_custom_call.1} parent=11 // pred_check_branch
          %264 = sbr.rel (%p262) target = $region28
        $region27: #{tpu_custom_call.1} parent=11 // pred_region
          _
        $region28: #{tpu_custom_call.1} parent=11 // pred_fallthru
          _
        // Predicated region
        $region29: #{tpu_custom_call.1} parent=11 // pred_check
          %p265 = pneg %p149
        $region30: #{tpu_custom_call.1} parent=11 // pred_check_branch
          %267 = sbr.rel (%p265) target = $region32
        $region31: #{tpu_custom_call.1} parent=11 // pred_region
          _
        $region32: #{tpu_custom_call.1} parent=11 // pred_fallthru
          _
        // Predicated region
        $region33: #{tpu_custom_call.1} parent=11 // pred_check
          %p268 = pneg %p170
        $region34: #{tpu_custom_call.1} parent=11 // pred_check_branch
          %270 = sbr.rel (%p268) target = $region36
        $region35: #{tpu_custom_call.1} parent=11 // pred_region
          _
        $region36: #{tpu_custom_call.1} parent=11 // pred_fallthru
          _
        // Predicated region
        $region37: #{tpu_custom_call.1} parent=11 // pred_check
          %p271 = pneg %p191
        $region38: #{tpu_custom_call.1} parent=11 // pred_check_branch
          %273 = sbr.rel (%p271) target = $region40
        $region39: #{tpu_custom_call.1} parent=11 // pred_region
          _
        $region40: #{tpu_custom_call.1} parent=11 // pred_fallthru
          _
        // Predicated region
        $region41: #{tpu_custom_call.1} parent=11 // pred_check
          %p274 = pneg %p212
        $region42: #{tpu_custom_call.1} parent=11 // pred_check_branch
          %276 = sbr.rel (%p274) target = $region44
        $region43: #{tpu_custom_call.1} parent=11 // pred_region
          _
        $region44: #{tpu_custom_call.1} parent=11 // pred_fallthru
          _
      $region12: #{tpu_custom_call.1} parent=5 // pred_fallthru
        _
      %p277 = scmp.lt.s32.totalorder %s18, 4
      // Predicated region
      $region45: #{tpu_custom_call.1} parent=5 // pred_check
        %p278 = pneg %p277
      $region46: #{tpu_custom_call.1} parent=5 // pred_check_branch
        %280 = sbr.rel (%p278) target = $region48
      $region47: #{tpu_custom_call.1} parent=5 // pred_region
        // Predicated region
        $region49: #{tpu_custom_call.1} parent=47 // pred_check
          %p281 = pneg %p38
        $region50: #{tpu_custom_call.1} parent=47 // pred_check_branch
          %283 = sbr.rel (%p281) target = $region52
        $region51: #{tpu_custom_call.1} parent=47 // pred_region
          %s284 = smul.u32 2, %s18
          %p285 = scmp.lt.s32.totalorder %s284, 7
          %s286 = scalar_select %p285, %s284, 7
          %s287 = smul.addr %s286, 2
          %s288 = scalar_lea.vmem %s0, %s287
          %s289 = smul.u32 2, %s18
        $region52: #{tpu_custom_call.1} parent=47 // pred_fallthru
          _
      $region48: #{tpu_custom_call.1} parent=5 // pred_fallthru
        _
      %p290 = scmp.le.s32.totalorder 1, %s18
      %p291 = scmp.lt.s32.totalorder %s18, 5
      %p292 = pnand %p290, %p291
      %p293 = pneg %p292
      // Predicated region
      $region53: #{tpu_custom_call.1} parent=5 // pred_check
        _
      $region54: #{tpu_custom_call.1} parent=5 // pred_check_branch
        %295 = sbr.rel (%p292) target = $region56
      $region55: #{tpu_custom_call.1} parent=5 // pred_region
        %s296 = ssub.s32 %s18, 1
        %s297 = smul.u32 2, %s23
        %p298 = scmp.lt.s32.totalorder %s297, 7
        %s299 = scalar_select %p298, %s297, 7
        %s300 = smul.addr %s299, 2
        %s301 = scalar_lea.vmem %s0, %s300
        %p302 = pneg %p44
        %p303 = pneg %p41
        %p304 = pneg %p65
        %p305 = pneg %p62
        %p306 = pneg %p86
        %p307 = pneg %p83
        %p308 = pneg %p107
        %p309 = pneg %p104
        %p310 = pneg %p128
        %p311 = pneg %p125
        %p312 = pneg %p149
        %p313 = pneg %p146
        %p314 = pneg %p170
        %p315 = pneg %p167
        %p316 = pneg %p191
        %p317 = pneg %p188
        %p318 = pneg %p212
        %p319 = pneg %p209
        %p320 = pneg %p238
        %p321 = pneg %p235
        %s322 = sand.u32 %s225, 1
        %s323 = scalar_lea.sflag [#allocation3], %s322
        %s324 = sand.u32 %s225, 1
        %s325 = smul.addr %s324, 4
        %s326 = scalar_lea.vmem [#allocation2], %s325
        %s327 = smul.u32 2, %s23
        %p328 = scmp.lt.s32.totalorder %s327, 7
        %s329 = scalar_select %p328, %s327, 7
        %s330 = smul.addr %s329, 2
        %s331 = scalar_lea.vmem %s0, %s330
        %s332 = smul.u32 2, %s23
        %s333 = smul.u32 2, %s23
        %v334 = vld [vmem:[%s331] sm:$0xf]
        %v335 = vld [vmem:[%s1] sm:$0xff]
        %v336 = vld [vmem:[%s1 + $0x8] sm:$0xff]
        %v337 = vld [vmem:[%s1 + $0x10] sm:$0xff]
        %v338 = vld [vmem:[%s1 + $0x18] sm:$0xff]
        %v339 = vld [vmem:[%s2] sm:$0xff]
        %v340 = vld [vmem:[%s2 + $0x8] sm:$0xff]
        %v341 = vld [vmem:[%s2 + $0x10] sm:$0xff]
        %v342 = vld [vmem:[%s2 + $0x18] sm:$0xff]
        %344 = vset.pattern.permute.xlu0 0
        %345 = vperm.xlu0 %344, %v335
        %v346 = vpop.permute.xlu0 %345
        %349 = vset.pattern.permute.xlu0 0
        %350 = vperm.xlu0 %349, %v336
        %v351 = vpop.permute.xlu0 %350
        %354 = vset.pattern.permute.xlu0 0
        %355 = vperm.xlu0 %354, %v337
        %v356 = vpop.permute.xlu0 %355
        %359 = vset.pattern.permute.xlu0 0
        %360 = vperm.xlu0 %359, %v338
        %v361 = vpop.permute.xlu0 %360
        %v364 = vperm.slane %v334, 0
        %v365 = vperm.slane %v334, 2
        %v368 = vperm.slane %v364, 0
        %v369 = vperm.slane %v365, 0
        %v370 = vmul.f32 %v346, %v368
        %v371 = vmul.f32 %v346, %v369
        %v372 = vmul.f32 %v351, %v368
        %v373 = vmul.f32 %v351, %v369
        %v374 = vmul.f32 %v356, %v368
        %v375 = vmul.f32 %v356, %v369
        %v376 = vmul.f32 %v361, %v368
        %v377 = vmul.f32 %v361, %v369
        %379 = vset.pattern.permute.xlu0 0
        %380 = vperm.xlu0 %379, %v339
        %v381 = vpop.permute.xlu0 %380
        %384 = vset.pattern.permute.xlu0 0
        %385 = vperm.xlu0 %384, %v340
        %v386 = vpop.permute.xlu0 %385
        %389 = vset.pattern.permute.xlu0 0
        %390 = vperm.xlu0 %389, %v341
        %v391 = vpop.permute.xlu0 %390
        %394 = vset.pattern.permute.xlu0 0
        %395 = vperm.xlu0 %394, %v342
        %v396 = vpop.permute.xlu0 %395
        %v398 = vadd.f32 %v381, %v370
        %v399 = vadd.f32 %v381, %v371
        %v400 = vadd.f32 %v386, %v372
        %v401 = vadd.f32 %v386, %v373
        %v402 = vadd.f32 %v391, %v374
        %v403 = vadd.f32 %v391, %v375
        %v404 = vadd.f32 %v396, %v376
        %v405 = vadd.f32 %v396, %v377
        %406 = vset.pattern.permute.xlu0 1
        %407 = vperm.xlu0 %406, %v335
        %v408 = vpop.permute.xlu0 %407
        %410 = vset.pattern.permute.xlu0 1
        %411 = vperm.xlu0 %410, %v336
        %v412 = vpop.permute.xlu0 %411
        %414 = vset.pattern.permute.xlu0 1
        %415 = vperm.xlu0 %414, %v337
        %v416 = vpop.permute.xlu0 %415
        %418 = vset.pattern.permute.xlu0 1
        %419 = vperm.xlu0 %418, %v338
        %v420 = vpop.permute.xlu0 %419
        %v422 = vperm.slane %v334, 1
        %v423 = vperm.slane %v334, 3
        %v426 = vperm.slane %v422, 1
        %v427 = vperm.slane %v423, 1
        %v428 = vmul.f32 %v408, %v426
        %v429 = vmul.f32 %v408, %v427
        %v430 = vmul.f32 %v412, %v426
        %v431 = vmul.f32 %v412, %v427
        %v432 = vmul.f32 %v416, %v426
        %v433 = vmul.f32 %v416, %v427
        %v434 = vmul.f32 %v420, %v426
        %v435 = vmul.f32 %v420, %v427
        %v436 = vadd.f32 %v398, %v428
        %v437 = vadd.f32 %v399, %v429
        %v438 = vadd.f32 %v400, %v430
        %v439 = vadd.f32 %v401, %v431
        %v440 = vadd.f32 %v402, %v432
        %v441 = vadd.f32 %v403, %v433
        %v442 = vadd.f32 %v404, %v434
        %v443 = vadd.f32 %v405, %v435
        %v444 = vtanh.pop %v436
        %v445 = vtanh.pop %v437
        %v446 = vtanh.pop %v438
        %v447 = vtanh.pop %v439
        %v448 = vtanh.pop %v440
        %v449 = vtanh.pop %v441
        %v450 = vtanh.pop %v442
        %v451 = vtanh.pop %v443
        %v452 = vld [vmem:[%s3] sm:$0xff]
        %v453 = vld [vmem:[%s3 + $0x8] sm:$0xff]
        %v454 = vld [vmem:[%s3 + $0x10] sm:$0xff]
        %v455 = vld [vmem:[%s3 + $0x18] sm:$0xff]
        %v456 = vld [vmem:[%s4] sm:$0xff]
        %v457 = vld [vmem:[%s4 + $0x8] sm:$0xff]
        %v458 = vld [vmem:[%s4 + $0x10] sm:$0xff]
        %v459 = vld [vmem:[%s4 + $0x18] sm:$0xff]
        %461 = vset.pattern.permute.xlu0 0
        %462 = vperm.xlu0 %461, %v456
        %v463 = vpop.permute.xlu0 %462
        %466 = vset.pattern.permute.xlu0 0
        %467 = vperm.xlu0 %466, %v457
        %v468 = vpop.permute.xlu0 %467
        %471 = vset.pattern.permute.xlu0 0
        %472 = vperm.xlu0 %471, %v458
        %v473 = vpop.permute.xlu0 %472
        %476 = vset.pattern.permute.xlu0 0
        %477 = vperm.xlu0 %476, %v459
        %v478 = vpop.permute.xlu0 %477
        %vm480 = vcmask 261120
        %v482 = vsel %vm480, %v452, 0
        %v485 = vsel %vm480, %v453, 0
        %v488 = vsel %vm480, %v454, 0
        %v491 = vsel %vm480, %v455, 0
        %493 = vmatpush.msra.mxu0 0.0
        %494 = vmatpush.msra.mxu0 0.0
        %495 = vmatpush.msra.mxu0 0.0
        %496 = vmatpush.msra.mxu0 0.0
        %497 = vmatpush.msra.mxu0 0.0
        %498 = vmatpush.msra.mxu0 0.0
        %499 = vmatpush.msra.mxu0 0.0
        %500 = vmatpush.msra.mxu0 0.0
        %501 = vmatpush.msra.mxu0 0.0
        %502 = vmatpush.msra.mxu0 0.0
        %503 = vmatpush.msra.mxu0 0.0
        %504 = vmatpush.msra.mxu0 0.0
        %505 = vmatpush.msra.mxu0 %v450
        %506 = vmatpush.msra.mxu0 %v448
        %507 = vmatpush.msra.mxu0 %v446
        %508 = vmatpush.msra.mxu0 %v444
        %509 = vmatmul.f32.gmra.mxu0 %v482
        %v510 = vpop.f32.mrf.mxu0
        %v511 = vadd.f32 %v463, %v510
        %512 = vmatmul.f32.gmra.mxu0 %v485
        %v513 = vpop.f32.mrf.mxu0
        %v514 = vadd.f32 %v468, %v513
        %515 = vmatmul.f32.gmra.mxu0 %v488
        %v516 = vpop.f32.mrf.mxu0
        %v517 = vadd.f32 %v473, %v516
        %518 = vmatmul.f32.gmra.mxu0 %v491
        %v519 = vpop.f32.mrf.mxu0
        %v520 = vadd.f32 %v478, %v519
        %521 = vdwg.mxu0
        %522 = vmatpush.msra.mxu0 0.0
        %523 = vmatpush.msra.mxu0 0.0
        %524 = vmatpush.msra.mxu0 0.0
        %525 = vmatpush.msra.mxu0 0.0
        %526 = vmatpush.msra.mxu0 0.0
        %527 = vmatpush.msra.mxu0 0.0
        %528 = vmatpush.msra.mxu0 0.0
        %529 = vmatpush.msra.mxu0 0.0
        %530 = vmatpush.msra.mxu0 0.0
        %531 = vmatpush.msra.mxu0 0.0
        %532 = vmatpush.msra.mxu0 0.0
        %533 = vmatpush.msra.mxu0 0.0
        %534 = vmatpush.msra.mxu0 %v451
        %535 = vmatpush.msra.mxu0 %v449
        %536 = vmatpush.msra.mxu0 %v447
        %537 = vmatpush.msra.mxu0 %v445
        %538 = vmatmul.f32.gmra.mxu0 %v482
        %v539 = vpop.f32.mrf.mxu0
        %v540 = vadd.f32 %v463, %v539
        %541 = vmatmul.f32.gmra.mxu0 %v485
        %v542 = vpop.f32.mrf.mxu0
        %v543 = vadd.f32 %v468, %v542
        %544 = vmatmul.f32.gmra.mxu0 %v488
        %v545 = vpop.f32.mrf.mxu0
        %v546 = vadd.f32 %v473, %v545
        %547 = vmatmul.f32.gmra.mxu0 %v491
        %v548 = vpop.f32.mrf.mxu0
        %v549 = vadd.f32 %v478, %v548
        %550 = vdwg.mxu0
        %v551 = vtanh.pop %v511
        %v552 = vtanh.pop %v540
        %v553 = vtanh.pop %v514
        %v554 = vtanh.pop %v543
        %v555 = vtanh.pop %v517
        %v556 = vtanh.pop %v546
        %v557 = vtanh.pop %v520
        %v558 = vtanh.pop %v549
        %v559 = vld [vmem:[%s5] sm:$0xff]
        %v560 = vld [vmem:[%s5 + $0x8] sm:$0xff]
        %v561 = vld [vmem:[%s5 + $0x10] sm:$0xff]
        %v562 = vld [vmem:[%s5 + $0x18] sm:$0xff]
        %v563 = vld [vmem:[%s6] sm:$0xff]
        %v564 = vld [vmem:[%s6 + $0x8] sm:$0xff]
        %v565 = vld [vmem:[%s6 + $0x10] sm:$0xff]
        %v566 = vld [vmem:[%s6 + $0x18] sm:$0xff]
        %568 = vset.pattern.permute.xlu0 0
        %569 = vperm.xlu0 %568, %v563
        %v570 = vpop.permute.xlu0 %569
        %573 = vset.pattern.permute.xlu0 0
        %574 = vperm.xlu0 %573, %v564
        %v575 = vpop.permute.xlu0 %574
        %578 = vset.pattern.permute.xlu0 0
        %579 = vperm.xlu0 %578, %v565
        %v580 = vpop.permute.xlu0 %579
        %583 = vset.pattern.permute.xlu0 0
        %584 = vperm.xlu0 %583, %v566
        %v585 = vpop.permute.xlu0 %584
        %v588 = vsel %vm480, %v559, 0
        %v591 = vsel %vm480, %v560, 0
        %v594 = vsel %vm480, %v561, 0
        %v597 = vsel %vm480, %v562, 0
        %599 = vmatpush.msra.mxu0 0.0
        %600 = vmatpush.msra.mxu0 0.0
        %601 = vmatpush.msra.mxu0 0.0
        %602 = vmatpush.msra.mxu0 0.0
        %603 = vmatpush.msra.mxu0 0.0
        %604 = vmatpush.msra.mxu0 0.0
        %605 = vmatpush.msra.mxu0 0.0
        %606 = vmatpush.msra.mxu0 0.0
        %607 = vmatpush.msra.mxu0 0.0
        %608 = vmatpush.msra.mxu0 0.0
        %609 = vmatpush.msra.mxu0 0.0
        %610 = vmatpush.msra.mxu0 0.0
        %611 = vmatpush.msra.mxu0 %v557
        %612 = vmatpush.msra.mxu0 %v555
        %613 = vmatpush.msra.mxu0 %v553
        %614 = vmatpush.msra.mxu0 %v551
        %615 = vmatmul.f32.gmra.mxu0 %v588
        %v616 = vpop.f32.mrf.mxu0
        %v617 = vadd.f32 %v570, %v616
        %618 = vmatmul.f32.gmra.mxu0 %v591
        %v619 = vpop.f32.mrf.mxu0
        %v620 = vadd.f32 %v575, %v619
        %621 = vmatmul.f32.gmra.mxu0 %v594
        %v622 = vpop.f32.mrf.mxu0
        %v623 = vadd.f32 %v580, %v622
        %624 = vmatmul.f32.gmra.mxu0 %v597
        %v625 = vpop.f32.mrf.mxu0
        %v626 = vadd.f32 %v585, %v625
        %627 = vdwg.mxu0
        %628 = vmatpush.msra.mxu0 0.0
        %629 = vmatpush.msra.mxu0 0.0
        %630 = vmatpush.msra.mxu0 0.0
        %631 = vmatpush.msra.mxu0 0.0
        %632 = vmatpush.msra.mxu0 0.0
        %633 = vmatpush.msra.mxu0 0.0
        %634 = vmatpush.msra.mxu0 0.0
        %635 = vmatpush.msra.mxu0 0.0
        %636 = vmatpush.msra.mxu0 0.0
        %637 = vmatpush.msra.mxu0 0.0
        %638 = vmatpush.msra.mxu0 0.0
        %639 = vmatpush.msra.mxu0 0.0
        %640 = vmatpush.msra.mxu0 %v558
        %641 = vmatpush.msra.mxu0 %v556
        %642 = vmatpush.msra.mxu0 %v554
        %643 = vmatpush.msra.mxu0 %v552
        %644 = vmatmul.f32.gmra.mxu0 %v588
        %v645 = vpop.f32.mrf.mxu0
        %v646 = vadd.f32 %v570, %v645
        %647 = vmatmul.f32.gmra.mxu0 %v591
        %v648 = vpop.f32.mrf.mxu0
        %v649 = vadd.f32 %v575, %v648
        %650 = vmatmul.f32.gmra.mxu0 %v594
        %v651 = vpop.f32.mrf.mxu0
        %v652 = vadd.f32 %v580, %v651
        %653 = vmatmul.f32.gmra.mxu0 %v597
        %v654 = vpop.f32.mrf.mxu0
        %v655 = vadd.f32 %v585, %v654
        %656 = vdwg.mxu0
        %v657 = vtanh.pop %v617
        %v658 = vtanh.pop %v646
        %v659 = vtanh.pop %v620
        %v660 = vtanh.pop %v649
        %v661 = vtanh.pop %v623
        %v662 = vtanh.pop %v652
        %v663 = vtanh.pop %v626
        %v664 = vtanh.pop %v655
        %v665 = vld [vmem:[%s7] sm:$0xff]
        %v667 = vsel %vm480, %v665, 0
        %669 = vmatpush.msra.mxu0 0.0
        %670 = vmatpush.msra.mxu0 0.0
        %671 = vmatpush.msra.mxu0 0.0
        %672 = vmatpush.msra.mxu0 0.0
        %673 = vmatpush.msra.mxu0 0.0
        %674 = vmatpush.msra.mxu0 0.0
        %675 = vmatpush.msra.mxu0 0.0
        %676 = vmatpush.msra.mxu0 0.0
        %677 = vmatpush.msra.mxu0 0.0
        %678 = vmatpush.msra.mxu0 0.0
        %679 = vmatpush.msra.mxu0 0.0
        %680 = vmatpush.msra.mxu0 0.0
        %681 = vmatpush.msra.mxu0 %v663
        %682 = vmatpush.msra.mxu0 %v661
        %683 = vmatpush.msra.mxu0 %v659
        %684 = vmatpush.msra.mxu0 %v657
        %685 = vmatmul.f32.gmra.mxu0 %v667
        %v686 = vpop.f32.mrf.mxu0
        %v687 = vadd.f32 0.0, %v686
        %688 = vdwg.mxu0
        %689 = vmatpush.msra.mxu0 0.0
        %690 = vmatpush.msra.mxu0 0.0
        %691 = vmatpush.msra.mxu0 0.0
        %692 = vmatpush.msra.mxu0 0.0
        %693 = vmatpush.msra.mxu0 0.0
        %694 = vmatpush.msra.mxu0 0.0
        %695 = vmatpush.msra.mxu0 0.0
        %696 = vmatpush.msra.mxu0 0.0
        %697 = vmatpush.msra.mxu0 0.0
        %698 = vmatpush.msra.mxu0 0.0
        %699 = vmatpush.msra.mxu0 0.0
        %700 = vmatpush.msra.mxu0 0.0
        %701 = vmatpush.msra.mxu0 %v664
        %702 = vmatpush.msra.mxu0 %v662
        %703 = vmatpush.msra.mxu0 %v660
        %704 = vmatpush.msra.mxu0 %v658
        %705 = vmatmul.f32.gmra.mxu0 %v667
        %v706 = vpop.f32.mrf.mxu0
        %v707 = vadd.f32 0.0, %v706
        %708 = vdwg.mxu0
        %v709 = vld [vmem:[%s8] sm:$0x3]
        %711 = vset.pattern.permute.xlu0 0
        %712 = vperm.xlu0 %711, %v709
        %v713 = vpop.permute.xlu0 %712
        %v715 = vadd.f32 %v687, %v713
        %v716 = vadd.f32 %v707, %v713
        %v719 = vrot.slane %v716, 6
        %vm720 = vcmask 1041408
        %v721 = vsel %vm720, %v715, %v719
        %723 = vst [vmem:[%s326] sm:$0xf] %v721
        %s724 = sand.u32 %s225, 1
        %s725 = scalar_lea.sflag [#allocation3], %s724
        %s726 = sand.u32 %s225, 1
        %s727 = smul.addr %s726, 4
        %s728 = scalar_lea.vmem [#allocation2], %s727
        // Predicated region
        $region57: #{tpu_custom_call.1} parent=55 // pred_check
          %p729 = pneg %p235
        $region58: #{tpu_custom_call.1} parent=55 // pred_check_branch
          %731 = sbr.rel (%p729) target = $region60
        $region59: #{tpu_custom_call.1} parent=55 // pred_region
          %s732 = smul.u32 2, %s23
          %734 = vsyncadd %s725, 0
          %s735 = smul.addr %s732, 2
          %s736 = scalar_lea.hbm %s9, %s735
          %s738 = sshll.u32 %s728, 4
          %s739 = int_to_ptr.vmem [resolvable:$true] %s738
          %s740 = sshll.u32 %s736, 4
          %s741 = int_to_ptr.hbm [resolvable:$true] %s740
          %743 = dma.vmem_to_hbm [thread:$0]  %s739, 64, %s741, %s725
        $region60: #{tpu_custom_call.1} parent=55 // pred_fallthru
          _
      $region56: #{tpu_custom_call.1} parent=5 // pred_fallthru
        _
      %p744 = scmp.le.s32.totalorder 2, %s18
      // Predicated region
      $region61: #{tpu_custom_call.1} parent=5 // pred_check
        %p745 = pneg %p744
      $region62: #{tpu_custom_call.1} parent=5 // pred_check_branch
        %747 = sbr.rel (%p745) target = $region64
      $region63: #{tpu_custom_call.1} parent=5 // pred_region
        %s748 = ssub.s32 %s18, 2
        // Predicated region
        $region65: #{tpu_custom_call.1} parent=63 // pred_check
          %p749 = pneg %p241
        $region66: #{tpu_custom_call.1} parent=63 // pred_check_branch
          %751 = sbr.rel (%p749) target = $region68
        $region67: #{tpu_custom_call.1} parent=63 // pred_region
          %s752 = sand.u32 %s226, 1
          %s753 = scalar_lea.sflag [#allocation3], %s752
          %s754 = sand.u32 %s226, 1
          %s755 = smul.addr %s754, 4
          %s756 = scalar_lea.vmem [#allocation2], %s755
          %758 = dma.done %s753, 64
        $region68: #{tpu_custom_call.1} parent=63 // pred_fallthru
          _
      $region64: #{tpu_custom_call.1} parent=5 // pred_fallthru
        _
    $region6: #{tpu_custom_call.1} parent=1 // loop_footer
      %s22 = sadd.s32 1, %s18
    $region7: #{tpu_custom_call.1} parent=1 // loop_footer_branch
      %17 = sbr.rel target = $region3
    $region8: #{tpu_custom_call.1} parent=1 // loop_exit
      _
    %759 = vsyncpa [#allocation3], 1
    %s760 = scalar_lea.sflag [#allocation3], 1
    %761 = vsyncpa %s760, 1

</llo_original>
